<compile_context>
chip_gen: v7x
topology: tpu7x:2x2x1
jax: 0.10.0
libtpu: 0.0.40
codegen_flags: <defaults>
</compile_context>

<pallas_src>
import math
from functools import partial

import jax
import jax.numpy as jnp
from jax.experimental import pallas as pl
from jax.experimental.pallas import tpu as pltpu


# ----------------------------------------------------------------------------
# Strategy 1: single HBM->HBM DMA (skip the VMEM round trip entirely).
# ----------------------------------------------------------------------------
def _dma_view_kernel(src_hbm, dst_hbm, sem):
    cp = pltpu.make_async_copy(src_hbm, dst_hbm, sem)
    cp.start()
    cp.wait()


def _view_dma(x2: jax.Array) -> jax.Array:
    """Materialize `x2` (already in the target shape) via one HBM->HBM DMA."""
    return pl.pallas_call(
        _dma_view_kernel,
        out_shape=jax.ShapeDtypeStruct(x2.shape, x2.dtype),
        in_specs=[pl.BlockSpec(memory_space=pl.ANY)],
        out_specs=pl.BlockSpec(memory_space=pl.ANY),
        scratch_shapes=[pltpu.SemaphoreType.DMA],
    )(x2)


# ----------------------------------------------------------------------------
# Strategy 2: lane-dense, pipelined VMEM copy (reference/compat path).
# ----------------------------------------------------------------------------
def _vmem_copy_kernel(x_ref, o_ref):
    # Identity copy of the current lane-dense tile (a view has no arithmetic).
    o_ref[...] = x_ref[...]


def _choose_slab(n: int):
    """Pick a (rows, lanes) factorization of n that is (8,128)-tile aligned."""
    for lanes in (1024, 512, 256, 128):
        if n % lanes == 0 and (n // lanes) % 8 == 0:
            return n // lanes, lanes
    return None


def _choose_block_rows(rows: int, lanes: int, itemsize: int,
                       target_bytes: int = 2 * 1024 * 1024) -> int:
    """Largest multiple-of-8 divisor of `rows` giving a <= ~2 MiB tile."""
    cap = max(8, (target_bytes // (lanes * itemsize)) // 8 * 8)
    tr = min(rows, cap)
    while tr >= 8:
        if rows % tr == 0:
            return tr
        tr -= 8
    return rows


def _view_tiled(x2: jax.Array) -> jax.Array:
    """Lane-dense, auto-pipelined VMEM copy of x2 (already in target shape)."""
    n = math.prod(x2.shape)
    slab = _choose_slab(n)
    if slab is None:
        # Odd element count: fall back to the single HBM->HBM DMA.
        return _view_dma(x2)
    rows, lanes = slab
    flat = jnp.reshape(x2, (rows, lanes))
    tr = _choose_block_rows(rows, lanes, x2.dtype.itemsize)
    out = pl.pallas_call(
        _vmem_copy_kernel,
        out_shape=jax.ShapeDtypeStruct((rows, lanes), x2.dtype),
        grid_spec=pltpu.PrefetchScalarGridSpec(
            num_scalar_prefetch=0,
            grid=(rows // tr,),
            in_specs=[pl.BlockSpec((tr, lanes), lambda i: (i, 0))],
            out_specs=pl.BlockSpec((tr, lanes), lambda i: (i, 0)),
        ),
        compiler_params=pltpu.CompilerParams(
            # Per-step footprint: 2 bufs x (in + out) x ~2 MiB ~= 8 MiB,
            # under v5e's 16 MiB default; explicit limit is headroom for v7x.
            vmem_limit_bytes=32 * 1024 * 1024,
            # "parallel" lets v7x shard the tile loop across both TensorCores.
            dimension_semantics=("parallel",),
        ),
    )(flat)
    return jnp.reshape(out, x2.shape)


# ----------------------------------------------------------------------------
# Public wrapper / module.
# ----------------------------------------------------------------------------
def view_pallas(x: jax.Array, shape, mode: str = "dma") -> jax.Array:
    """Equivalent of torch's x.view(batch_size, *shape)."""
    batch = x.shape[0]
    total = math.prod(x.shape[1:])
    shape = tuple(int(s) for s in shape)
    if shape.count(-1) == 1:  # torch .view -1 inference
        rest = math.prod(s for s in shape if s != -1)
        if rest == 0 or total % rest != 0:
            raise ValueError(f"cannot view {x.shape} as {(batch, *shape)}")
        shape = tuple(total // rest if s == -1 else s for s in shape)
    if math.prod(shape) != total:
        raise ValueError(f"cannot view {x.shape} as {(batch, *shape)}")

    target = (batch, *shape)
    # Row-major reshape == torch .view reinterpretation.  This is the single
    # unavoidable relayout; the Pallas kernel then materializes the result
    # with exactly one pass over the bytes.
    x2 = jnp.reshape(x, target)
    if mode == "tiled":
        return _view_tiled(x2)
    return _view_dma(x2)


class View:
    """JAX/Pallas mirror of the PyTorch View module (no parameters)."""

    def __init__(self, shape, mode: str = "dma"):
        if mode not in ("dma", "tiled"):
            raise ValueError(f"unknown mode: {mode!r}")
        self.shape = tuple(shape)
        self.mode = mode
        self._fn = jax.jit(partial(view_pallas, shape=self.shape, mode=mode))

    def __repr__(self):
        return f"View{self.shape}"

    def __call__(self, x):
        return self._fn(x)


if __name__ == "__main__":
    key = jax.random.PRNGKey(0)
    # NCHW input, small shapes: batch=2, channels=4, spatial 16x16.
    x = jax.random.normal(key, (2, 4, 16, 16), dtype=jnp.float32)

    # Reference: torch .view(batch, 16, 64) == row-major reshape.
    ref = jnp.reshape(x, (2, 16, 64))

    # Default (recommended) path: single HBM->HBM DMA, no VMEM round trip.
    out_dma = jax.block_until_ready(View((16, 64), mode="dma")(x))
    assert out_dma.shape == (2, 16, 64), out_dma.shape
    assert out_dma.dtype == x.dtype
    assert bool(jnp.array_equal(out_dma, ref))

    # Tiled, lane-dense, pipelined VMEM copy path.
    out_tiled = jax.block_until_ready(View((16, 64), mode="tiled")(x))
    assert out_tiled.shape == (2, 16, 64), out_tiled.shape
    assert out_tiled.dtype == x.dtype
    assert bool(jnp.array_equal(out_tiled, ref))

    print("KERNEL_OK")
</pallas_src>

<mosaic_0001>
module attributes {stable_mosaic.version = 11 : i64} {
  func.func @_dma_view_kernel(%arg0: memref<2x16x64xf32, #tpu.memory_space<any>>, %arg1: memref<2x16x64xf32, #tpu.memory_space<any>>, %arg2: memref<!tpu.dma_semaphore, #tpu.memory_space<semaphore_mem>>) attributes {dimension_semantics = [], scalar_prefetch = 0 : i64, scratch_operands = 1 : i64, tpu.core_type = #tpu.core_type<tc>} {
    tpu.enqueue_dma source(%arg0 : memref<2x16x64xf32, #tpu.memory_space<any>>) target(%arg1 : memref<2x16x64xf32, #tpu.memory_space<any>>) target_semaphore(%arg2 : memref<!tpu.dma_semaphore, #tpu.memory_space<semaphore_mem>>)
    tpu.wait_dma2 semaphore(%arg2 : memref<!tpu.dma_semaphore, #tpu.memory_space<semaphore_mem>>) src(%arg0 : memref<2x16x64xf32, #tpu.memory_space<any>>) dst(%arg1 : memref<2x16x64xf32, #tpu.memory_space<any>>)
    return
  }
}

</mosaic_0001>

<llo_original>
// kernel: view_pallas.1
$region0: #{view_pallas.1}
  #allocation0 [shape = 'u32[]', space=smem, size = 0x4, offset = 0x4, fixed_abs, tag = 'smem constant byte address 0x4 - core index']
  #allocation1 [shape = 'u32[144,128]{1,0:T(1,128)}', space=vmem, size = 0x12000, scoped, tag = 'internal scratch']
  #allocation2 [shape = 's32[1]{0}', space=sflag, size = 0x4, scoped, tag = 'scratch operand']
  #allocation3 [shape = 's32[]', space=sflag, size = 0x4, offset = 0, fixed_abs, tag = 'sflag constant byte address 0x0 - dummy sync flag']
  #allocation4 [shape = 's32[]', space=sflag, size = 0x4, offset = 0, fixed_abs, tag = 'sflag constant byte address 0x0 - dummy sync flag']
  #allocation5 [shape = 'u32[]', space=smem, size = 0x4, offset = 0x44, fixed_abs, tag = 'smem constant byte address 0x44 - assertion arg 0']
  #allocation6 [shape = 'u32[]', space=smem, size = 0x4, offset = 0x48, fixed_abs, tag = 'smem constant byte address 0x48 - assertion arg 1']
  %s0 = inlined_call_operand.vmem [shape: f32[2,16,64], index: 0, kind: input, shape index: {}]
  %s1 = inlined_call_operand.hbm [shape: f32[2,16,64], index: 1, kind: output, shape index: {}]
  %s2 = sld [smem:[#allocation0]]
  $region6: #{view_pallas.1} parent=0
    _
  %s4 = ssub.s32 1, %s2
  %s5 = scalar_select 0, %s4, %s2
  // Predicated region
  $region2: #{view_pallas.1} parent=0 // pred_check
    _
  $region3: #{view_pallas.1} parent=0 // pred_check_branch
    %7 = sbr.rel target = $region5
  $region4: #{view_pallas.1} parent=0 // pred_region
    %8 = sst [smem:[#allocation5]] [#allocation4]
    %9 = sst [smem:[#allocation6]] [#allocation3]
  $region5: #{view_pallas.1} parent=0 // pred_fallthru
    _
  %11 = shalt.err (0)
  %s13 = sshll.u32 %s0, 4
  %s14 = int_to_ptr.vmem [resolvable:$true] %s13
  %16 = dma.vmem_to_hbm [thread:$0]  %s14, 512, %s1, [#allocation2]
  %s17 = smul.u32 2, 16
  %s18 = smul.u32 %s17, 1
  %s19 = sshll.u32 %s18, 4
  %20 = dma.done [#allocation2], %s19
  %21 = vsyncmov [#allocation2]
  %s22 = vpop.sfrf %21
  %p23 = scmp.eq.s32.totalorder %s22, 0
  %p24 = pneg %p23
  %26 = shalt.err (%p24)

</llo_original>
